<compile_context>
chip_gen: v7x
topology: tpu7x:2x2x1
jax: 0.10.0
libtpu: 0.0.40
codegen_flags: <defaults>
</compile_context>

<pallas_src>
import jax
import jax.numpy as jnp
import numpy as np
from jax.experimental import pallas as pl
from jax.experimental.pallas import tpu as pltpu


def _round_up(a, m):
    return ((a + m - 1) // m) * m


# ----------------------------------------------------------------------------
# Fused Pallas kernel: per-tile one-hot gather + per-class (S_c, N_c) accumulation
# ----------------------------------------------------------------------------
def _center_loss_kernel(tgt_ref, x_ref, c_ref, s_ref, n_ref):
    """Accumulate per-class squared-distance sums and counts.

    tgt_ref: (TB, 1)  i32  class index per sample (-1 for padded rows)
    x_ref:   (TB, D)  any  input features (upcast to f32 in-kernel)
    c_ref:   (C, D)   any  class centers (resident across the grid)
    s_ref:   (8, C)   f32  OUT: per-class sum of squared distances (row 0 used)
    n_ref:   (8, C)   f32  OUT: per-class sample counts          (row 0 used)
    """
    t = pl.program_id(1)

    # New parallel slice / first batch tile: zero this slice's accumulators.
    @pl.when(t == 0)
    def _init():
        s_ref[...] = jnp.zeros_like(s_ref)
        n_ref[...] = jnp.zeros_like(n_ref)

    tb = x_ref.shape[0]
    c = c_ref.shape[0]

    # One-hot of targets; padded / out-of-range targets give an all-zero row,
    # so they contribute to neither S_c nor N_c.
    tgt = tgt_ref[...]                                             # (TB, 1) i32
    class_ids = jax.lax.broadcasted_iota(jnp.int32, (tb, c), 1)    # (TB, C)
    onehot = (jnp.broadcast_to(tgt, (tb, c)) == class_ids).astype(jnp.float32)

    # Gather center[target] as a one-hot matmul on the MXU (exact in f32).
    x = x_ref[...].astype(jnp.float32)                             # (TB, D)
    centers = c_ref[...].astype(jnp.float32)                       # (C, D)
    center_exp = jnp.dot(onehot, centers,
                         preferred_element_type=jnp.float32)       # (TB, D)

    diff = x - center_exp
    sq = jnp.sum(diff * diff, axis=1, keepdims=True)               # (TB, 1)

    # Per-class reductions for this tile (no per-sample division anywhere).
    s_tile = jnp.sum(onehot * sq, axis=0, keepdims=True)           # (1, C)
    n_tile = jnp.sum(onehot, axis=0, keepdims=True)                # (1, C)

    # Accumulate into row 0 of the sublane-padded (8, C) output block
    # (block kept at 8 rows to satisfy the (8, 128) tiling constraint).
    rows = jax.lax.broadcasted_iota(jnp.int32, (8, c), 0)
    s_ref[...] += jnp.where(rows == 0, jnp.broadcast_to(s_tile, (8, c)), 0.0)
    n_ref[...] += jnp.where(rows == 0, jnp.broadcast_to(n_tile, (8, c)), 0.0)


# ----------------------------------------------------------------------------
# Wrapper
# ----------------------------------------------------------------------------
def center_loss(x, center, target, lambdas, *, batch_tile=512, num_parallel=2):
    """x: (B, D); center: (C, D); target: (B,) int; lambdas: scalar."""
    b, d = x.shape
    c, d2 = center.shape
    assert d == d2, (d, d2)

    # Batch tile: multiple of 8 sublanes, capped (512 rows * 128 f32 = 256 KiB).
    tb = _round_up(min(batch_tile, _round_up(b, 8)), 8)
    total_tiles = (b + tb - 1) // tb
    p = max(1, min(num_parallel, total_tiles))      # parallel slices (megacore)
    total_tiles = _round_up(total_tiles, p)
    tiles_per_slice = total_tiles // p
    b_padded = total_tiles * tb

    # Pad batch; padded rows get target=-1 -> zero one-hot -> no contribution.
    pad = b_padded - b
    tgt_i32 = target.astype(jnp.int32)
    if pad:
        x_p = jnp.pad(x, ((0, pad), (0, 0)))
        tgt_i32 = jnp.pad(tgt_i32, (0, pad), constant_values=-1)
    else:
        x_p = x
    tgt2d = tgt_i32.reshape(b_padded, 1)

    grid = (p, tiles_per_slice)

    def batch_map(pi, ti):
        return (pi * tiles_per_slice + ti, 0)

    def out_map(pi, ti):
        return (pi, 0)

    itemsize_x = jnp.dtype(x.dtype).itemsize
    itemsize_c = jnp.dtype(center.dtype).itemsize
    cost = pl.CostEstimate(
        flops=2 * b_padded * c * d + 3 * b_padded * d + 6 * b_padded * c,
        transcendentals=0,
        bytes_accessed=(b_padded * d * itemsize_x + b_padded * 4
                        + c * d * itemsize_c + 2 * 8 * p * c * 4),
    )

    out_s, out_n = pl.pallas_call(
        _center_loss_kernel,
        grid=grid,
        out_shape=(jax.ShapeDtypeStruct((8 * p, c), jnp.float32),
                   jax.ShapeDtypeStruct((8 * p, c), jnp.float32)),
        in_specs=[
            pl.BlockSpec((tb, 1), batch_map),                 # targets
            pl.BlockSpec((tb, d), batch_map),                 # features
            pl.BlockSpec((c, d), lambda pi, ti: (0, 0)),      # centers (resident)
        ],
        out_specs=(pl.BlockSpec((8, c), out_map),
                   pl.BlockSpec((8, c), out_map)),
        compiler_params=pltpu.CompilerParams(
            dimension_semantics=("parallel", "arbitrary"),
            vmem_limit_bytes=32 * 1024 * 1024,
        ),
        cost_estimate=cost,
    )(tgt2d, x_p, center)

    # Tiny epilogue: combine per-slice partials, C reciprocals, final scale.
    s_c = jnp.sum(out_s, axis=0)                               # (C,)
    n_c = jnp.sum(out_n, axis=0)                               # (C,)
    per_class = jnp.where(n_c > 0, s_c / jnp.maximum(n_c, 1.0), 0.0)
    lam = jnp.asarray(lambdas, jnp.float32)
    return lam * 0.5 * jnp.sum(per_class) / b


# ----------------------------------------------------------------------------
# Pure-JAX reference (correctness check only)
# ----------------------------------------------------------------------------
def _ref_center_loss(x, center, target, lambdas):
    c = center.shape[0]
    center_exp = center[target]                                   # (B, D)
    onehot = jax.nn.one_hot(target, c, dtype=jnp.float32)
    count = jnp.sum(onehot, axis=0)                               # histc for int labels
    count_exp = count[target]                                     # (B,)
    sq = jnp.sum((x - center_exp) ** 2, axis=1)                   # (B,)
    return lambdas / 2.0 * jnp.mean(sq / count_exp)


# ----------------------------------------------------------------------------
if __name__ == "__main__":
    key = jax.random.PRNGKey(0)
    kx, kc, kt = jax.random.split(key, 3)

    # Module defaults: num_classes=4, feature_dim=128. Small batch.
    B, C, D = 8, 4, 128
    x = jax.random.normal(kx, (B, D), jnp.float32)
    center = jax.random.normal(kc, (C, D), jnp.float32)
    target = jax.random.randint(kt, (B,), 0, C, jnp.int32)
    lambdas = 0.5

    loss = jax.block_until_ready(center_loss(x, center, target, lambdas))
    ref = jax.block_until_ready(_ref_center_loss(x, center, target, lambdas))
    np.testing.assert_allclose(np.asarray(loss), np.asarray(ref),
                               rtol=2e-5, atol=1e-5)

    # Larger case exercising batch tiling, padding and the 2-way parallel split.
    B2 = 1000
    kx2, kt2 = jax.random.split(kx)
    x2 = jax.random.normal(kx2, (B2, D), jnp.float32)
    target2 = jax.random.randint(kt2, (B2,), 0, C, jnp.int32)
    loss2 = jax.block_until_ready(
        center_loss(x2, center, target2, lambdas, batch_tile=256))
    ref2 = jax.block_until_ready(_ref_center_loss(x2, center, target2, lambdas))
    np.testing.assert_allclose(np.asarray(loss2), np.asarray(ref2),
                               rtol=1e-4, atol=1e-5)

    print("KERNEL_OK")
</pallas_src>

<mosaic_0001>
module attributes {stable_mosaic.version = 11 : i64} {
  func.func @_center_loss_kernel(%arg0: i32, %arg1: i32, %arg2: memref<8x1xi32, #tpu.memory_space<vmem>>, %arg3: memref<8x128xf32, #tpu.memory_space<vmem>>, %arg4: memref<4x128xf32, #tpu.memory_space<vmem>>, %arg5: memref<8x4xf32, #tpu.memory_space<vmem>>, %arg6: memref<8x4xf32, #tpu.memory_space<vmem>>) attributes {dimension_semantics = [#tpu.dimension_semantics<parallel>, #tpu.dimension_semantics<arbitrary>], iteration_bounds = array<i64: 1, 1>, scalar_prefetch = 0 : i64, scratch_operands = 0 : i64, tpu.core_type = #tpu.core_type<tc>, window_params = [{transform_indices = @transform_0, window_bounds = array<i64: 8, 1>}, {transform_indices = @transform_1, window_bounds = array<i64: 8, 128>}, {pipeline_mode = #tpu.pipeline_mode<synchronous>, transform_indices = @transform_2, window_bounds = array<i64: 4, 128>}, {transform_indices = @transform_3, window_bounds = array<i64: 8, 4>}, {transform_indices = @transform_4, window_bounds = array<i64: 8, 4>}]} {
    %c0_i32 = arith.constant 0 : i32
    %0 = arith.cmpi eq, %arg1, %c0_i32 : i32
    %1 = arith.extui %0 : i1 to i32
    %c0_i32_0 = arith.constant 0 : i32
    %2 = arith.cmpi ne, %1, %c0_i32_0 : i32
    scf.if %2 {
      %cst_21 = arith.constant 0.000000e+00 : f32
      %42 = vector.broadcast %cst_21 : f32 to vector<8x4xf32>
      %c0_22 = arith.constant 0 : index
      %c0_23 = arith.constant 0 : index
      %43 = vector.load %arg5[%c0_22, %c0_23] : memref<8x4xf32, #tpu.memory_space<vmem>>, vector<8x4xf32>
      tpu.vector_store %arg5[%c0_22, %c0_23], %42 {strides = array<i32>} : memref<8x4xf32, #tpu.memory_space<vmem>>, vector<8x4xf32>,
      %cst_24 = arith.constant 0.000000e+00 : f32
      %44 = vector.broadcast %cst_24 : f32 to vector<8x4xf32>
      %c0_25 = arith.constant 0 : index
      %c0_26 = arith.constant 0 : index
      %45 = vector.load %arg6[%c0_25, %c0_26] : memref<8x4xf32, #tpu.memory_space<vmem>>, vector<8x4xf32>
      tpu.vector_store %arg6[%c0_25, %c0_26], %44 {strides = array<i32>} : memref<8x4xf32, #tpu.memory_space<vmem>>, vector<8x4xf32>,
    } else {
    }
    %c0 = arith.constant 0 : index
    %c0_1 = arith.constant 0 : index
    %3 = vector.load %arg2[%c0, %c0_1] : memref<8x1xi32, #tpu.memory_space<vmem>>, vector<8x1xi32>
    %4 = tpu.iota {dimensions = array<i32: 1>} : vector<8x4xi32>
    %5 = vector.shape_cast %3 : vector<8x1xi32> to vector<8x1xi32>
    %6 = vector.broadcast %5 : vector<8x1xi32> to vector<8x4xi32>
    %7 = arith.cmpi eq, %6, %4 : vector<8x4xi32>
    %8 = arith.extui %7 : vector<8x4xi1> to vector<8x4xi32>
    %9 = arith.sitofp %8 : vector<8x4xi32> to vector<8x4xf32>
    %c0_2 = arith.constant 0 : index
    %c0_3 = arith.constant 0 : index
    %10 = vector.load %arg3[%c0_2, %c0_3] : memref<8x128xf32, #tpu.memory_space<vmem>>, vector<8x128xf32>
    %c0_4 = arith.constant 0 : index
    %c0_5 = arith.constant 0 : index
    %11 = vector.load %arg4[%c0_4, %c0_5] : memref<4x128xf32, #tpu.memory_space<vmem>>, vector<4x128xf32>
    %cst = arith.constant dense<0.000000e+00> : vector<8x128xf32>
    %12 = tpu.matmul %9, %11, %cst {dimension_numbers = #tpu.dot_dimension_numbers<[1], [0], [0], [1], [0, 0, 1, 1], [], []>} : vector<8x4xf32>, vector<4x128xf32>, vector<8x128xf32> -> vector<8x128xf32>
    %13 = arith.subf %10, %12 : vector<8x128xf32>
    %14 = arith.mulf %13, %13 : vector<8x128xf32>
    %cst_6 = arith.constant dense<0.000000e+00> : vector<8xf32>
    %15 = vector.multi_reduction <add>, %14, %cst_6 [1] : vector<8x128xf32> to vector<8xf32>
    %16 = vector.shape_cast %15 : vector<8xf32> to vector<8x1xf32>
    %17 = vector.broadcast %16 : vector<8x1xf32> to vector<8x4xf32>
    %18 = arith.mulf %9, %17 : vector<8x4xf32>
    %cst_7 = arith.constant dense<0.000000e+00> : vector<4xf32>
    %19 = vector.multi_reduction <add>, %18, %cst_7 [0] : vector<8x4xf32> to vector<4xf32>
    %20 = vector.shape_cast %19 : vector<4xf32> to vector<1x4xf32>
    %cst_8 = arith.constant dense<0.000000e+00> : vector<4xf32>
    %21 = vector.multi_reduction <add>, %9, %cst_8 [0] : vector<8x4xf32> to vector<4xf32>
    %22 = vector.shape_cast %21 : vector<4xf32> to vector<1x4xf32>
    %23 = tpu.iota {dimensions = array<i32: 0>} : vector<8x4xi32>
    %c0_9 = arith.constant 0 : index
    %c0_10 = arith.constant 0 : index
    %24 = vector.load %arg5[%c0_9, %c0_10] : memref<8x4xf32, #tpu.memory_space<vmem>>, vector<8x4xf32>
    %c0_i32_11 = arith.constant 0 : i32
    %25 = vector.broadcast %c0_i32_11 : i32 to vector<8x4xi32>
    %26 = arith.cmpi eq, %23, %25 : vector<8x4xi32>
    %27 = vector.shape_cast %20 : vector<1x4xf32> to vector<1x4xf32>
    %28 = vector.broadcast %27 : vector<1x4xf32> to vector<8x4xf32>
    %cst_12 = arith.constant 0.000000e+00 : f32
    %29 = vector.broadcast %cst_12 : f32 to vector<8x4xf32>
    %30 = arith.select %26, %28, %29 : vector<8x4xi1>, vector<8x4xf32>
    %31 = arith.addf %24, %30 : vector<8x4xf32>
    %c0_13 = arith.constant 0 : index
    %c0_14 = arith.constant 0 : index
    %32 = vector.load %arg5[%c0_13, %c0_14] : memref<8x4xf32, #tpu.memory_space<vmem>>, vector<8x4xf32>
    tpu.vector_store %arg5[%c0_13, %c0_14], %31 {strides = array<i32>} : memref<8x4xf32, #tpu.memory_space<vmem>>, vector<8x4xf32>,
    %c0_15 = arith.constant 0 : index
    %c0_16 = arith.constant 0 : index
    %33 = vector.load %arg6[%c0_15, %c0_16] : memref<8x4xf32, #tpu.memory_space<vmem>>, vector<8x4xf32>
    %c0_i32_17 = arith.constant 0 : i32
    %34 = vector.broadcast %c0_i32_17 : i32 to vector<8x4xi32>
    %35 = arith.cmpi eq, %23, %34 : vector<8x4xi32>
    %36 = vector.shape_cast %22 : vector<1x4xf32> to vector<1x4xf32>
    %37 = vector.broadcast %36 : vector<1x4xf32> to vector<8x4xf32>
    %cst_18 = arith.constant 0.000000e+00 : f32
    %38 = vector.broadcast %cst_18 : f32 to vector<8x4xf32>
    %39 = arith.select %35, %37, %38 : vector<8x4xi1>, vector<8x4xf32>
    %40 = arith.addf %33, %39 : vector<8x4xf32>
    %c0_19 = arith.constant 0 : index
    %c0_20 = arith.constant 0 : index
    %41 = vector.load %arg6[%c0_19, %c0_20] : memref<8x4xf32, #tpu.memory_space<vmem>>, vector<8x4xf32>
    tpu.vector_store %arg6[%c0_19, %c0_20], %40 {strides = array<i32>} : memref<8x4xf32, #tpu.memory_space<vmem>>, vector<8x4xf32>,
    return
  }
  func.func @transform_0(%arg0: i32, %arg1: i32) -> (i32, i32) {
    %c1_i32 = arith.constant 1 : i32
    %0 = arith.muli %arg0, %c1_i32 : i32
    %1 = arith.addi %0, %arg1 : i32
    %c0_i32 = arith.constant 0 : i32
    %c0_i32_0 = arith.constant 0 : i32
    return %1, %c0_i32 : i32, i32
  }
  func.func @transform_1(%arg0: i32, %arg1: i32) -> (i32, i32) {
    %c1_i32 = arith.constant 1 : i32
    %0 = arith.muli %arg0, %c1_i32 : i32
    %1 = arith.addi %0, %arg1 : i32
    %c0_i32 = arith.constant 0 : i32
    %c0_i32_0 = arith.constant 0 : i32
    return %1, %c0_i32 : i32, i32
  }
  func.func @transform_2(%arg0: i32, %arg1: i32) -> (i32, i32) {
    %c0_i32 = arith.constant 0 : i32
    %c0_i32_0 = arith.constant 0 : i32
    %c0_i32_1 = arith.constant 0 : i32
    return %c0_i32, %c0_i32_0 : i32, i32
  }
  func.func @transform_3(%arg0: i32, %arg1: i32) -> (i32, i32) {
    %c0_i32 = arith.constant 0 : i32
    %c0_i32_0 = arith.constant 0 : i32
    return %arg0, %c0_i32 : i32, i32
  }
  func.func @transform_4(%arg0: i32, %arg1: i32) -> (i32, i32) {
    %c0_i32 = arith.constant 0 : i32
    %c0_i32_0 = arith.constant 0 : i32
    return %arg0, %c0_i32 : i32, i32
  }
}

</mosaic_0001>

<llo_original>
// kernel: tpu_custom_call.1
$region0: #{tpu_custom_call.1}
  #allocation0 [shape = 'u32[]', space=smem, size = 0x4, offset = 0x4, fixed_abs, tag = 'smem constant byte address 0x4 - core index']
  #allocation1 [shape = 'u32[144,128]{1,0:T(1,128)}', space=vmem, size = 0x12000, scoped, tag = 'internal scratch']
  %s0 = inlined_call_operand.vmem [shape: s32[8,1], index: 0, kind: input, shape index: {}]
  %s1 = inlined_call_operand.vmem [shape: f32[8,128], index: 1, kind: input, shape index: {}]
  %s2 = inlined_call_operand.vmem [shape: f32[4,128], index: 2, kind: input, shape index: {}]
  %s3 = inlined_call_operand.vmem [shape: f32[8,4], index: 3, kind: output, shape index: {0}]
  %s4 = inlined_call_operand.vmem [shape: f32[8,4], index: 4, kind: output, shape index: {1}]
  %5 = xla_tuple %s3, %s4
  %s6 = sld [smem:[#allocation0]]
  $region34: #{tpu_custom_call.1} parent=0
    _
  %s8 = ssub.s32 1, %s6
  %s9 = scalar_select 0, %s8, %s6
  // Predicated region
  $region2: #{tpu_custom_call.1} parent=0 // pred_check
    _
  $region3: #{tpu_custom_call.1} parent=0 // pred_check_branch
    %11 = sbr.rel (0) target = $region5
  $region4: #{tpu_custom_call.1} parent=0 // pred_region
    %s12 = sadd.s32 0, 0
    %p13 = scmp.lt.s32.totalorder %s12, 0
    %s14 = scalar_select %p13, %s12, 0
    %s15 = smul.addr %s14, 8
    %s16 = scalar_lea.vmem %s0, %s15
    %s17 = sadd.s32 0, 0
  $region5: #{tpu_custom_call.1} parent=0 // pred_fallthru
    _
  // Predicated region
  $region6: #{tpu_custom_call.1} parent=0 // pred_check
    _
  $region7: #{tpu_custom_call.1} parent=0 // pred_check_branch
    %19 = sbr.rel (0) target = $region9
  $region8: #{tpu_custom_call.1} parent=0 // pred_region
    %s20 = sadd.s32 0, 0
    %p21 = scmp.lt.s32.totalorder %s20, 0
    %s22 = scalar_select %p21, %s20, 0
    %s23 = smul.addr %s22, 8
    %s24 = scalar_lea.vmem %s1, %s23
    %s25 = sadd.s32 0, 0
  $region9: #{tpu_custom_call.1} parent=0 // pred_fallthru
    _
  // Predicated region
  $region10: #{tpu_custom_call.1} parent=0 // pred_check
    _
  $region11: #{tpu_custom_call.1} parent=0 // pred_check_branch
    %27 = sbr.rel (0) target = $region13
  $region12: #{tpu_custom_call.1} parent=0 // pred_region
    _
  $region13: #{tpu_custom_call.1} parent=0 // pred_fallthru
    _
  %s28 = sadd.s32 0, 0
  %p29 = scmp.lt.s32.totalorder %s28, 0
  %s30 = scalar_select %p29, %s28, 0
  %s31 = smul.addr %s30, 8
  %s32 = scalar_lea.vmem %s0, %s31
  %s33 = sadd.s32 0, 0
  %p34 = scmp.lt.s32.totalorder %s33, 0
  %s35 = scalar_select %p34, %s33, 0
  %s36 = smul.addr %s35, 8
  %s37 = scalar_lea.vmem %s1, %s36
  %s38 = sadd.s32 0, 0
  %p39 = scmp.lt.s32.totalorder %s38, 0
  %s40 = scalar_select %p39, %s38, 0
  %s41 = smul.addr %s40, 8
  %s42 = scalar_lea.vmem %s0, %s41
  %s43 = sadd.s32 0, 0
  %s44 = sadd.s32 0, 0
  %p45 = scmp.lt.s32.totalorder %s44, 0
  %s46 = scalar_select %p45, %s44, 0
  %s47 = smul.addr %s46, 8
  %s48 = scalar_lea.vmem %s1, %s47
  %s49 = sadd.s32 0, 0
  %p50 = scmp.eq.s32.totalorder 0, 0
  // Predicated region
  $region14: #{tpu_custom_call.1} parent=0 // pred_check
    %p51 = pneg %p50
  $region15: #{tpu_custom_call.1} parent=0 // pred_check_branch
    %53 = sbr.rel (%p51) target = $region17
  $region16: #{tpu_custom_call.1} parent=0 // pred_region
    %vm54 = vcmask 31744
    %55 = vst.msk [vmem:[%s3] sm:$0xff] %vm54, 0.0
    %56 = vst.msk [vmem:[%s4] sm:$0xff] %vm54, 0.0
  $region17: #{tpu_custom_call.1} parent=0 // pred_fallthru
    _
  %v57 = vld [vmem:[%s42] sm:$0xff]
  %v58 = vlaneseq
  %v59 = vand.u32 %v58, 127
  %60 = vset.pattern.permute.xlu0 0
  %61 = vperm.xlu0 %60, %v57
  %v62 = vpop.permute.xlu0 %61
  %vm63 = vcmp.eq.s32.totalorder %v62, %v59
  %v64 = vsel %vm63, 1, 0
  %v65 = vcvt.s32.f32 %v64
  %v66 = vld [vmem:[%s48] sm:$0xff]
  %v67 = vld [vmem:[%s2] sm:$0xf]
  %vm68 = vcmask 31744
  %v70 = vsel %vm68, %v65, 0
  %vm72 = vcmask 1043456
  %v74 = vsel %vm72, %v67, 0
  %76 = vmatprep.subr.mxu0 0.0
  %77 = vmatpush1.msra.mxu0 %v74
  %78 = vmatprep.subr.mxu0 0.0
  %79 = vmatpush1.msra.mxu0 0.0
  %80 = vmatprep.subr.mxu0 0.0
  %81 = vmatpush1.msra.mxu0 0.0
  %82 = vmatprep.subr.mxu0 0.0
  %83 = vmatpush1.msra.mxu0 0.0
  %84 = vmatprep.subr.mxu0 0.0
  %85 = vmatpush1.msra.mxu0 0.0
  %86 = vmatprep.subr.mxu0 0.0
  %87 = vmatpush1.msra.mxu0 0.0
  %88 = vmatprep.subr.mxu0 0.0
  %89 = vmatpush1.msra.mxu0 0.0
  %90 = vmatprep.subr.mxu0 0.0
  %91 = vmatpush1.msra.mxu0 0.0
  %92 = vmatprep.subr.mxu0 0.0
  %93 = vmatpush1.msra.mxu0 0.0
  %94 = vmatprep.subr.mxu0 0.0
  %95 = vmatpush1.msra.mxu0 0.0
  %96 = vmatprep.subr.mxu0 0.0
  %97 = vmatpush1.msra.mxu0 0.0
  %98 = vmatprep.subr.mxu0 0.0
  %99 = vmatpush1.msra.mxu0 0.0
  %100 = vmatprep.subr.mxu0 0.0
  %101 = vmatpush1.msra.mxu0 0.0
  %102 = vmatprep.subr.mxu0 0.0
  %103 = vmatpush1.msra.mxu0 0.0
  %104 = vmatprep.subr.mxu0 0.0
  %105 = vmatpush1.msra.mxu0 0.0
  %106 = vmatprep.subr.mxu0 0.0
  %107 = vmatpush1.msra.mxu0 0.0
  %108 = vmatprep.subr.mxu0 0.0
  %109 = vmatpush1.msra.mxu0 0.0
  %110 = vmatprep.subr.mxu0 0.0
  %111 = vmatpush1.msra.mxu0 0.0
  %112 = vmatprep.subr.mxu0 0.0
  %113 = vmatpush1.msra.mxu0 0.0
  %114 = vmatprep.subr.mxu0 0.0
  %115 = vmatpush1.msra.mxu0 0.0
  %116 = vmatprep.subr.mxu0 0.0
  %117 = vmatpush1.msra.mxu0 0.0
  %118 = vmatprep.subr.mxu0 0.0
  %119 = vmatpush1.msra.mxu0 0.0
  %120 = vmatprep.subr.mxu0 0.0
  %121 = vmatpush1.msra.mxu0 0.0
  %122 = vmatprep.subr.mxu0 0.0
  %123 = vmatpush1.msra.mxu0 0.0
  %124 = vmatprep.subr.mxu0 0.0
  %125 = vmatpush1.msra.mxu0 0.0
  %126 = vmatprep.subr.mxu0 0.0
  %127 = vmatpush1.msra.mxu0 0.0
  %128 = vmatprep.subr.mxu0 0.0
  %129 = vmatpush1.msra.mxu0 0.0
  %130 = vmatprep.subr.mxu0 0.0
  %131 = vmatpush1.msra.mxu0 0.0
  %132 = vmatprep.subr.mxu0 0.0
  %133 = vmatpush1.msra.mxu0 0.0
  %134 = vmatprep.subr.mxu0 0.0
  %135 = vmatpush1.msra.mxu0 0.0
  %136 = vmatprep.subr.mxu0 0.0
  %137 = vmatpush1.msra.mxu0 0.0
  %138 = vmatprep.subr.mxu0 0.0
  %139 = vmatpush1.msra.mxu0 0.0
  %140 = vmatprep.mubr.f32.mxu0 0.0
  %141 = vmatmul.mubr.f32.gmra.mrb[0].mxu0 %v70
  %v142 = vpop.f32.mrb[0].mxu0
  %v143 = vadd.f32 0.0, %v142
  %v144 = vpop.f32.mrb[0].mxu0
  %145 = vdwg.mxu0
  %v146 = vsub.f32 %v66, %v143
  %v147 = vmul.f32 %v146, %v146
  %148 = vadd.xlane.f32.xlu0 %v147
  %v149 = vpop.xlane.xlu0 %148
  %v150 = vmul.f32 %v65, %v149
  %v151 = vsel %vm68, %v150, 0.0
  %v152 = vrot.slane %v151, 4
  %v153 = vadd.f32 %v151, %v152
  %v154 = vrot.slane %v153, 2
  %v155 = vadd.f32 %v153, %v154
  %v156 = vrot.slane %v155, 1
  %v157 = vadd.f32 %v155, %v156
  %v158 = vsel %vm68, %v65, 0.0
  %v159 = vrot.slane %v158, 4
  %v160 = vadd.f32 %v158, %v159
  %v161 = vrot.slane %v160, 2
  %v162 = vadd.f32 %v160, %v161
  %v163 = vrot.slane %v162, 1
  %v164 = vadd.f32 %v162, %v163
  %v165 = vlaneseq
  %v166 = vshrl.u32 %v165, 7
  %v167 = vld [vmem:[%s3] sm:$0xff]
  %vm168 = vcmp.eq.s32.totalorder %v166, 0
  %v169 = vsel %vm168, %v157, 0.0
  %v170 = vadd.f32 %v167, %v169
  %171 = vst.msk [vmem:[%s3] sm:$0xff] %vm68, %v170
  %v172 = vld [vmem:[%s4] sm:$0xff]
  %v173 = vsel %vm168, %v164, 0.0
  %v174 = vadd.f32 %v172, %v173
  %175 = vst.msk [vmem:[%s4] sm:$0xff] %vm68, %v174
  // Predicated region
  $region18: #{tpu_custom_call.1} parent=0 // pred_check
    _
  $region19: #{tpu_custom_call.1} parent=0 // pred_check_branch
    %177 = sbr.rel (0) target = $region21
  $region20: #{tpu_custom_call.1} parent=0 // pred_region
    _
  $region21: #{tpu_custom_call.1} parent=0 // pred_fallthru
    _
  // Predicated region
  $region22: #{tpu_custom_call.1} parent=0 // pred_check
    _
  $region23: #{tpu_custom_call.1} parent=0 // pred_check_branch
    %179 = sbr.rel (0) target = $region25
  $region24: #{tpu_custom_call.1} parent=0 // pred_region
    _
  $region25: #{tpu_custom_call.1} parent=0 // pred_fallthru
    _
  // Predicated region
  $region26: #{tpu_custom_call.1} parent=0 // pred_check
    _
  $region27: #{tpu_custom_call.1} parent=0 // pred_check_branch
    %181 = sbr.rel (0) target = $region29
  $region28: #{tpu_custom_call.1} parent=0 // pred_region
    _
  $region29: #{tpu_custom_call.1} parent=0 // pred_fallthru
    _
  // Predicated region
  $region30: #{tpu_custom_call.1} parent=0 // pred_check
    _
  $region31: #{tpu_custom_call.1} parent=0 // pred_check_branch
    %183 = sbr.rel (0) target = $region33
  $region32: #{tpu_custom_call.1} parent=0 // pred_region
    _
  $region33: #{tpu_custom_call.1} parent=0 // pred_fallthru
    _

</llo_original>
